<compile_context>
chip_gen: v7x
topology: tpu7x:2x2x1
jax: 0.10.0
libtpu: 0.0.40
codegen_flags: <defaults>
</compile_context>

<pallas_src>
import jax
import jax.numpy as jnp
from jax.experimental import pallas as pl
from jax.experimental.pallas import tpu as pltpu


def _round_up(x, m):
    return ((x + m - 1) // m) * m


def _vmem_budget():
    """Generation-aware VMEM sizing (v5e/v6e: 128 MiB, v7x: 64 MiB per TC)."""
    cap = 64 * 1024 * 1024  # conservative default == v7x per-core VMEM
    try:
        info = pltpu.get_tpu_info()
        c = getattr(info, "vmem_capacity_bytes", None)
        if c:
            cap = int(c)
    except Exception:
        pass
    # Leave headroom below physical VMEM for compiler-internal scratch.
    limit = min(int(cap * 0.70), 100 * 1024 * 1024)
    return cap, limit


def _choose_fused_tiles(M, N, K, budget_bytes, in_itemsize, out_itemsize, tm_cap):
    """Pick (tm, tn) for the K-folded kernel, or None if K is too large to fold.

    Preference order: largest tn (weight residency, lane-dense stores), then the
    largest activation tile tm that still fits the double-buffered VMEM budget.
    All candidate tiles are either multiples of (8, 128) or the full array dim,
    so no padding of the operands is ever required.
    """
    def footprint(tm, tn):
        return (2 * tm * K * in_itemsize      # x panel, double-buffered
                + 2 * K * tn * in_itemsize    # weight panel, double-buffered
                + 2 * tm * tn * out_itemsize  # output tile, double-buffered
                + 2 * tn * 4)                 # bias tile (f32)

    m_first = min(M, tm_cap)
    m_cands = [m_first] + [t for t in (256, 128) if t < m_first]
    n_cands = [N] + [t for t in (2048, 1024, 512, 256, 128) if t < N]
    for tn in n_cands:
        for tm in m_cands:
            if footprint(tm, tn) <= budget_bytes:
                return tm, tn
    return None


def _expert_linear_fused_kernel(x_ref, w_ref, b_ref, o_ref):
    # x_ref: (tm, K) bf16   w_ref: (K, tn) bf16   b_ref: (1, tn) f32
    # Full-K block: single MXU pass with f32 accumulation, bias added in f32.
    acc = jnp.dot(x_ref[...], w_ref[...], preferred_element_type=jnp.float32)
    o_ref[...] = (acc + b_ref[...]).astype(o_ref.dtype)


def _expert_linear_reduce_kernel(x_ref, w_ref, b_ref, o_ref, acc_ref):
    # Fallback path (K too large to keep resident): tiled reduction over K.
    k = pl.program_id(2)

    @pl.when(k == 0)
    def _():
        acc_ref[...] = jnp.zeros_like(acc_ref)

    acc_ref[...] += jnp.dot(
        x_ref[...], w_ref[...], preferred_element_type=jnp.float32
    )

    @pl.when(k == pl.num_programs(2) - 1)
    def _():
        o_ref[...] = (acc_ref[...] + b_ref[...]).astype(o_ref.dtype)


def expert_forward(x, w, b, gate_w, *, compute_dtype=jnp.bfloat16):
    """Expert.forward(x) == module(x) == x @ W + b (gate is unused in forward).

    x:      (..., D)
    w:      (D, D)   -- inner Linear weight stored as [in, out]
    b:      (D,)     -- inner Linear bias
    gate_w: (1, D)   -- Expert.gate weight, unused in forward (kept for parity)
    """
    del gate_w  # not used in Expert.forward (matches the PyTorch module)

    orig_shape = x.shape
    D_in = orig_shape[-1]
    x2d = x.reshape(-1, D_in)
    M, K = x2d.shape
    N = w.shape[1]
    out_dtype = x.dtype
    out_itemsize = jnp.dtype(out_dtype).itemsize
    in_itemsize = jnp.dtype(compute_dtype).itemsize

    # bf16 MXU operands; bias stays f32 for the epilogue.
    xc = x2d if x2d.dtype == compute_dtype else x2d.astype(compute_dtype)
    wc = w if w.dtype == compute_dtype else w.astype(compute_dtype)
    b2d = b.astype(jnp.float32).reshape(1, N)

    cap, vmem_limit = _vmem_budget()
    tm_cap = 512 if cap >= 96 * 1024 * 1024 else 256  # v5e/v6e vs v7x
    budget = int(vmem_limit * 0.85)

    cost = pl.CostEstimate(
        flops=2 * M * N * K,
        transcendentals=0,
        bytes_accessed=(xc.size * in_itemsize + wc.size * in_itemsize
                        + b2d.size * 4 + M * N * out_itemsize),
    )

    tiles = _choose_fused_tiles(M, N, K, budget, in_itemsize, out_itemsize, tm_cap)

    if tiles is not None:
        tm, tn = tiles
        # N outermost / M innermost: the (K, tn) weight panel's block index is
        # constant across the inner M sweep, so Pallas fetches it once per N
        # panel (W read from HBM exactly once in total).
        grid = (pl.cdiv(N, tn), pl.cdiv(M, tm))
        out2d = pl.pallas_call(
            _expert_linear_fused_kernel,
            out_shape=jax.ShapeDtypeStruct((M, N), out_dtype),
            grid_spec=pltpu.PrefetchScalarGridSpec(
                num_scalar_prefetch=0,
                grid=grid,
                in_specs=[
                    pl.BlockSpec((tm, K), lambda j, i: (i, 0)),   # activations
                    pl.BlockSpec((K, tn), lambda j, i: (0, j)),   # weight panel
                    pl.BlockSpec((1, tn), lambda j, i: (0, j)),   # bias
                ],
                out_specs=pl.BlockSpec((tm, tn), lambda j, i: (i, j)),
            ),
            compiler_params=pltpu.CompilerParams(
                dimension_semantics=("parallel", "parallel"),
                vmem_limit_bytes=int(vmem_limit),
            ),
            cost_estimate=cost,
        )(xc, wc, b2d)
        return out2d.reshape(*orig_shape[:-1], N)

    # ------- Fallback: K too large to fold; 3-D grid with K reduction -------
    # (Essentially unreachable for realistic d_model; kept for completeness.)
    tm = min(tm_cap, _round_up(M, 8))
    tn = 256 if N >= 256 else _round_up(N, 128)
    tk = 512
    Mp, Np, Kp = _round_up(M, tm), _round_up(N, tn), _round_up(K, tk)
    x_p = xc if (Mp == M and Kp == K) else jnp.pad(xc, ((0, Mp - M), (0, Kp - K)))
    w_p = wc if (Kp == K and Np == N) else jnp.pad(wc, ((0, Kp - K), (0, Np - N)))
    b_p = b2d if Np == N else jnp.pad(b2d, ((0, 0), (0, Np - N)))
    grid = (Mp // tm, Np // tn, Kp // tk)
    out2d = pl.pallas_call(
        _expert_linear_reduce_kernel,
        out_shape=jax.ShapeDtypeStruct((Mp, Np), out_dtype),
        grid_spec=pltpu.PrefetchScalarGridSpec(
            num_scalar_prefetch=0,
            grid=grid,
            in_specs=[
                pl.BlockSpec((tm, tk), lambda i, j, k: (i, k)),
                pl.BlockSpec((tk, tn), lambda i, j, k: (k, j)),
                pl.BlockSpec((1, tn), lambda i, j, k: (0, j)),
            ],
            out_specs=pl.BlockSpec((tm, tn), lambda i, j, k: (i, j)),
            scratch_shapes=[pltpu.VMEM((tm, tn), jnp.float32)],
        ),
        compiler_params=pltpu.CompilerParams(
            dimension_semantics=("parallel", "parallel", "arbitrary"),
            vmem_limit_bytes=int(vmem_limit),
        ),
        cost_estimate=cost,
    )(x_p, w_p, b_p)
    return out2d[:M, :N].reshape(*orig_shape[:-1], N)


def init_expert_params(key, d_model, dtype=jnp.float32):
    """Deterministic init mimicking nn.Linear defaults (uniform(+-1/sqrt(fan_in)))."""
    k_gate, k_w, k_b = jax.random.split(key, 3)
    bound = 1.0 / (d_model ** 0.5)
    # Expert.gate: Linear(d_model, 1, bias=False) -> weight shape (1, d_model)
    gate_w = jax.random.uniform(k_gate, (1, d_model), dtype, -bound, bound)
    # inner module: Linear(d_model, d_model); stored transposed as [in, out]
    w = jax.random.uniform(k_w, (d_model, d_model), dtype, -bound, bound)
    b = jax.random.uniform(k_b, (d_model,), dtype, -bound, bound)
    return gate_w, w, b


if __name__ == "__main__":
    key = jax.random.PRNGKey(0)
    k_x, k_p = jax.random.split(key)

    batch, seq, d_model = 2, 8, 32
    x = jax.random.normal(k_x, (batch, seq, d_model), jnp.float32)
    gate_w, w, b = init_expert_params(k_p, d_model)

    out = expert_forward(x, w, b, gate_w)
    out = jax.block_until_ready(out)

    # Reference with matching bf16 operand rounding (f32 accumulation).
    x_bf = x.astype(jnp.bfloat16).astype(jnp.float32)
    w_bf = w.astype(jnp.bfloat16).astype(jnp.float32)
    ref = (x_bf.reshape(-1, d_model) @ w_bf + b).reshape(batch, seq, d_model)

    assert out.shape == (batch, seq, d_model)
    assert jnp.allclose(out, ref, atol=5e-3, rtol=5e-3), float(
        jnp.max(jnp.abs(out - ref))
    )

    print("KERNEL_OK")
</pallas_src>

<mosaic_0001>
module attributes {stable_mosaic.version = 11 : i64} {
  func.func @_expert_linear_fused_kernel(%arg0: i32, %arg1: i32, %arg2: memref<16x32xbf16, #tpu.memory_space<vmem>>, %arg3: memref<32x32xbf16, #tpu.memory_space<vmem>>, %arg4: memref<1x32xf32, #tpu.memory_space<vmem>>, %arg5: memref<16x32xf32, #tpu.memory_space<vmem>>) attributes {dimension_semantics = [#tpu.dimension_semantics<parallel>, #tpu.dimension_semantics<parallel>], iteration_bounds = array<i64: 1, 1>, scalar_prefetch = 0 : i64, scratch_operands = 0 : i64, tpu.core_type = #tpu.core_type<tc>, window_params = [{transform_indices = @transform_0, window_bounds = array<i64: 16, 32>}, {transform_indices = @transform_1, window_bounds = array<i64: 32, 32>}, {transform_indices = @transform_2, window_bounds = array<i64: 1, 32>}, {transform_indices = @transform_3, window_bounds = array<i64: 16, 32>}]} {
    %c0 = arith.constant 0 : index
    %c0_0 = arith.constant 0 : index
    %0 = vector.load %arg2[%c0, %c0_0] : memref<16x32xbf16, #tpu.memory_space<vmem>>, vector<16x32xbf16>
    %c0_1 = arith.constant 0 : index
    %c0_2 = arith.constant 0 : index
    %1 = vector.load %arg3[%c0_1, %c0_2] : memref<32x32xbf16, #tpu.memory_space<vmem>>, vector<32x32xbf16>
    %cst = arith.constant dense<0.000000e+00> : vector<16x32xf32>
    %2 = tpu.matmul %0, %1, %cst {dimension_numbers = #tpu.dot_dimension_numbers<[1], [0], [0], [1], [0, 0, 1, 1], [], []>} : vector<16x32xbf16>, vector<32x32xbf16>, vector<16x32xf32> -> vector<16x32xf32>
    %c0_3 = arith.constant 0 : index
    %c0_4 = arith.constant 0 : index
    %3 = vector.load %arg4[%c0_3, %c0_4] : memref<1x32xf32, #tpu.memory_space<vmem>>, vector<1x32xf32>
    %4 = vector.broadcast %3 : vector<1x32xf32> to vector<16x32xf32>
    %5 = arith.addf %2, %4 : vector<16x32xf32>
    %c0_5 = arith.constant 0 : index
    %c0_6 = arith.constant 0 : index
    %6 = vector.load %arg5[%c0_5, %c0_6] : memref<16x32xf32, #tpu.memory_space<vmem>>, vector<16x32xf32>
    tpu.vector_store %arg5[%c0_5, %c0_6], %5 {strides = array<i32>} : memref<16x32xf32, #tpu.memory_space<vmem>>, vector<16x32xf32>,
    return
  }
  func.func @transform_0(%arg0: i32, %arg1: i32) -> (i32, i32) {
    %c0_i32 = arith.constant 0 : i32
    %c0_i32_0 = arith.constant 0 : i32
    return %arg1, %c0_i32 : i32, i32
  }
  func.func @transform_1(%arg0: i32, %arg1: i32) -> (i32, i32) {
    %c0_i32 = arith.constant 0 : i32
    %c0_i32_0 = arith.constant 0 : i32
    return %c0_i32, %arg0 : i32, i32
  }
  func.func @transform_2(%arg0: i32, %arg1: i32) -> (i32, i32) {
    %c0_i32 = arith.constant 0 : i32
    %c0_i32_0 = arith.constant 0 : i32
    return %c0_i32, %arg0 : i32, i32
  }
  func.func @transform_3(%arg0: i32, %arg1: i32) -> (i32, i32) {
    %c0_i32 = arith.constant 0 : i32
    return %arg1, %arg0 : i32, i32
  }
}

</mosaic_0001>

<llo_original>
// kernel: tpu_custom_call.1
$region0: #{tpu_custom_call.1}
  #allocation0 [shape = 'u32[]', space=smem, size = 0x4, offset = 0x4, fixed_abs, tag = 'smem constant byte address 0x4 - core index']
  #allocation1 [shape = 'u32[144,128]{1,0:T(1,128)}', space=vmem, size = 0x12000, scoped, tag = 'internal scratch']
  %s0 = inlined_call_operand.hbm [shape: bf16[16,32], index: 0, kind: input, shape index: {}]
  %s1 = inlined_call_operand.hbm [shape: bf16[32,32], index: 1, kind: input, shape index: {}]
  %s2 = inlined_call_operand.vmem [shape: f32[1,32], index: 2, kind: input, shape index: {}]
  %s3 = inlined_call_operand.hbm [shape: f32[16,32], index: 3, kind: output, shape index: {}]
  %s4 = sld [smem:[#allocation0]]
  $region30: #{tpu_custom_call.1} parent=0
    _
  %s6 = ssub.s32 1, %s4
  %s7 = scalar_select 0, %s6, %s4
  $region1: #{tpu_custom_call.1} parent=0
    #allocation2 [shape = 'u8[4096]{0}', space=vmem, size = 0x1000, scoped, tag = 'input window, operand 0, single buffered']
    #allocation3 [shape = 's32[1]{0}', space=sflag, size = 0x4, scoped, tag = 'scoped memory for tpu_custom_call.1']
    #allocation4 [shape = 's32[1]{0}', space=sflag, size = 0x4, scoped, tag = 'scoped memory for tpu_custom_call.1']
    #allocation5 [shape = 'u8[8192]{0}', space=vmem, size = 0x2000, scoped, tag = 'input window, operand 1, single buffered']
    #allocation6 [shape = 's32[1]{0}', space=sflag, size = 0x4, scoped, tag = 'scoped memory for tpu_custom_call.1']
    #allocation7 [shape = 'u8[8192]{0}', space=vmem, size = 0x2000, scoped, tag = 'output window, operand 0, single buffered']
    %8 = vsyncpa [#allocation3], 0
    %9 = vsyncpa [#allocation6], 0
    %10 = vsyncpa [#allocation4], 0
    // Predicated region
    $region2: #{tpu_custom_call.1} parent=1 // pred_check
      _
    $region3: #{tpu_custom_call.1} parent=1 // pred_check_branch
      %12 = sbr.rel (0) target = $region5
    $region4: #{tpu_custom_call.1} parent=1 // pred_region
      %s14 = ssub.s32 128, 128
      %15 = vsyncadd [#allocation3], %s14
      %s16 = sshll.u32 [#allocation2], 4
      %s17 = int_to_ptr.vmem [resolvable:$true] %s16
      %22 = dma.hbm_to_vmem [thread:$0]  %s0, 128, %s17, [#allocation3], 64, 64, 4
    $region5: #{tpu_custom_call.1} parent=1 // pred_fallthru
      _
    // Predicated region
    $region6: #{tpu_custom_call.1} parent=1 // pred_check
      _
    $region7: #{tpu_custom_call.1} parent=1 // pred_check_branch
      %24 = sbr.rel (0) target = $region9
    $region8: #{tpu_custom_call.1} parent=1 // pred_region
      %s26 = ssub.s32 256, 256
      %27 = vsyncadd [#allocation6], %s26
      %s28 = sshll.u32 [#allocation5], 4
      %s29 = int_to_ptr.vmem [resolvable:$true] %s28
      %34 = dma.hbm_to_vmem [thread:$0]  %s1, 256, %s29, [#allocation6], 64, 64, 4
    $region9: #{tpu_custom_call.1} parent=1 // pred_fallthru
      _
    // Predicated region
    $region10: #{tpu_custom_call.1} parent=1 // pred_check
      _
    $region11: #{tpu_custom_call.1} parent=1 // pred_check_branch
      %36 = sbr.rel (0) target = $region13
    $region12: #{tpu_custom_call.1} parent=1 // pred_region
      _
    $region13: #{tpu_custom_call.1} parent=1 // pred_fallthru
      _
    // Predicated region
    $region14: #{tpu_custom_call.1} parent=1 // pred_check
      _
    $region15: #{tpu_custom_call.1} parent=1 // pred_check_branch
      %38 = sbr.rel (0) target = $region17
    $region16: #{tpu_custom_call.1} parent=1 // pred_region
      %39 = dma.done [#allocation3], 128
    $region17: #{tpu_custom_call.1} parent=1 // pred_fallthru
      _
    // Predicated region
    $region18: #{tpu_custom_call.1} parent=1 // pred_check
      _
    $region19: #{tpu_custom_call.1} parent=1 // pred_check_branch
      %41 = sbr.rel (0) target = $region21
    $region20: #{tpu_custom_call.1} parent=1 // pred_region
      %42 = dma.done [#allocation6], 256
    $region21: #{tpu_custom_call.1} parent=1 // pred_fallthru
      _
    %v44 = vld [vmem:[#allocation2] sm:$0xf]
    %v45 = vld [vmem:[#allocation2 + $0x4] sm:$0xf]
    %v46 = vld [vmem:[#allocation5] sm:$0xf]
    %v47 = vld [vmem:[#allocation5 + $0x4] sm:$0xf]
    %v48 = vld [vmem:[#allocation5 + $0x8] sm:$0xf]
    %v49 = vld [vmem:[#allocation5 + $0xc] sm:$0xf]
    %v50 = vld [vmem:[%s2] sm:$0x1]
    %v52 = vlaneseq
    %v53 = vshrl.u32 %v52, 7
    %v54 = vsub.s32 0, %v53
    %v55 = vrot.slane %v50, %v54
    %v59 = vunpack.c.l.b16 %v44
    %v60 = vunpack.c.l.b16 %v45
    %v61 = vpack.c.b16 %v60, %v59
    %v66 = vunpack.c.l.b16 %v46
    %v67 = vunpack.c.l.b16 %v47
    %v68 = vunpack.c.l.b16 %v48
    %v69 = vunpack.c.l.b16 %v49
    %v70 = vpack.c.b16 %v67, %v66
    %v71 = vpack.c.b16 %v69, %v68
    %vm74 = vcmask 261120
    %v76 = vsel %vm74, %v61, 0
    %78 = vmatprep.subr.bf16.mxu0 0
    %79 = vmatpush1.bf16.msra.mxu0 %v70
    %80 = vmatprep.subr.bf16.mxu0 0
    %81 = vmatpush1.bf16.msra.mxu0 %v71
    %82 = vmatprep.subr.bf16.mxu0 0
    %83 = vmatpush1.bf16.msra.mxu0 0
    %84 = vmatprep.subr.bf16.mxu0 0
    %85 = vmatpush1.bf16.msra.mxu0 0
    %86 = vmatprep.subr.bf16.mxu0 0
    %87 = vmatpush1.bf16.msra.mxu0 0
    %88 = vmatprep.subr.bf16.mxu0 0
    %89 = vmatpush1.bf16.msra.mxu0 0
    %90 = vmatprep.subr.bf16.mxu0 0
    %91 = vmatpush1.bf16.msra.mxu0 0
    %92 = vmatprep.subr.bf16.mxu0 0
    %93 = vmatpush1.bf16.msra.mxu0 0
    %94 = vmatprep.subr.bf16.mxu0 0
    %95 = vmatpush1.bf16.msra.mxu0 0
    %96 = vmatprep.subr.bf16.mxu0 0
    %97 = vmatpush1.bf16.msra.mxu0 0
    %98 = vmatprep.subr.bf16.mxu0 0
    %99 = vmatpush1.bf16.msra.mxu0 0
    %100 = vmatprep.subr.bf16.mxu0 0
    %101 = vmatpush1.bf16.msra.mxu0 0
    %102 = vmatprep.subr.bf16.mxu0 0
    %103 = vmatpush1.bf16.msra.mxu0 0
    %104 = vmatprep.subr.bf16.mxu0 0
    %105 = vmatpush1.bf16.msra.mxu0 0
    %106 = vmatprep.subr.bf16.mxu0 0
    %107 = vmatpush1.bf16.msra.mxu0 0
    %108 = vmatprep.subr.bf16.mxu0 0
    %109 = vmatpush1.bf16.msra.mxu0 0
    %110 = vmatprep.mubr.bf16.mxu0 0
    %111 = vmatmul.mubr.bf16.gmra.mrb[0].mxu0 %v76
    %v112 = vpop.f32.mrb[0].mxu0
    %v113 = vadd.f32 %v55, %v112
    %v114 = vpop.f32.mrb[0].mxu0
    %v115 = vpop.f32.mrb[0].mxu0
    %v116 = vadd.f32 %v55, %v115
    %v117 = vpop.f32.mrb[0].mxu0
    %118 = vdwg.mxu0
    %119 = vst.msk [vmem:[#allocation7] sm:$0xff] %vm74, %v113
    %120 = vst.msk [vmem:[#allocation7 + $0x8] sm:$0xff] %vm74, %v116
    // Predicated region
    $region22: #{tpu_custom_call.1} parent=1 // pred_check
      _
    $region23: #{tpu_custom_call.1} parent=1 // pred_check_branch
      %122 = sbr.rel (0) target = $region25
    $region24: #{tpu_custom_call.1} parent=1 // pred_region
      %s124 = ssub.s32 256, 256
      %125 = vsyncadd [#allocation4], %s124
      %s126 = sshll.u32 [#allocation7], 4
      %s127 = int_to_ptr.vmem [resolvable:$true] %s126
      %132 = dma.vmem_to_hbm [thread:$0]  %s127, 256, %s3, [#allocation4], 128, 128, 8
    $region25: #{tpu_custom_call.1} parent=1 // pred_fallthru
      _
    // Predicated region
    $region26: #{tpu_custom_call.1} parent=1 // pred_check
      _
    $region27: #{tpu_custom_call.1} parent=1 // pred_check_branch
      %134 = sbr.rel (0) target = $region29
    $region28: #{tpu_custom_call.1} parent=1 // pred_region
      %135 = dma.done [#allocation4], 256
    $region29: #{tpu_custom_call.1} parent=1 // pred_fallthru
      _
    %136 = vsyncpa [#allocation3], 1
    %137 = vsyncpa [#allocation6], 1
    %138 = vsyncpa [#allocation4], 1

</llo_original>
